<compile_context>
chip_gen: v7x
topology: tpu7x:2x2x1
jax: 0.10.0
libtpu: 0.0.40
codegen_flags: <defaults>
</compile_context>

<pallas_src>
import functools

import jax
import jax.numpy as jnp
from jax.experimental import pallas as pl
from jax.experimental.pallas import tpu as pltpu


def _round_up(x, m):
    return ((x + m - 1) // m) * m


# ---------------------------------------------------------------------------
# Kernel
# ---------------------------------------------------------------------------
def _encoder_kernel(scale_ref, x_ref, w_ref, b_ref, o_ref, *, normalize, approx_recip):
    # scale_ref: (1,) f32 in SMEM  (g / ||V||_F)
    # x_ref: (tm, Kp)   w_ref: (Kp, Ep) resident   b_ref: (1, Ep) f32   o_ref: (tm, Ep)
    s = scale_ref[0]
    acc = jnp.dot(x_ref[...], w_ref[...],
                  preferred_element_type=jnp.float32)        # MXU, f32 accumulate
    feat = acc * s + b_ref[...]                              # fold weight-norm scalar + bias
    if normalize:
        sq = jnp.sum(feat * feat, axis=-1, keepdims=True)    # (tm, 1)
        norm = jnp.sqrt(sq) + 1e-8
        if approx_recip:
            feat = feat * pl.reciprocal(norm, approx=True)   # EUP slot, ~free
        else:
            feat = feat / norm
    # NOTE: rows beyond M in the ragged last block may hold garbage (possibly
    # inf/NaN after the epilogue); their stores are masked off by Pallas.
    o_ref[...] = feat.astype(o_ref.dtype)


# ---------------------------------------------------------------------------
# Generation-aware configuration
# ---------------------------------------------------------------------------
@functools.lru_cache(maxsize=1)
def _vmem_budgets():
    """(tile_budget_bytes, vmem_limit_bytes, tm_target) for the local TPU gen."""
    try:
        info = pltpu.get_tpu_info()
        cap = int(getattr(info, "vmem_capacity_bytes", 64 * 1024 * 1024))
    except Exception:
        cap = 64 * 1024 * 1024                      # conservative: v7x per-TC
    if cap >= 100 * 1024 * 1024:                    # v5e / v6e: 128 MiB VMEM
        return 90 * 1024 * 1024, 100 * 1024 * 1024, 1024
    return 40 * 1024 * 1024, 48 * 1024 * 1024, 512  # v7x: 64 MiB per TensorCore


@functools.lru_cache(maxsize=1)
def _single_buffer_supported():
    """One-time trace-time probe: does this jax/backend accept pl.Buffered(1)?"""
    def _copy_kernel(x_ref, o_ref):
        o_ref[...] = x_ref[...]
    try:
        fn = pl.pallas_call(
            _copy_kernel,
            out_shape=jax.ShapeDtypeStruct((8, 128), jnp.float32),
            grid=(1,),
            in_specs=[pl.BlockSpec((8, 128), lambda i: (0, 0),
                                   pipeline_mode=pl.Buffered(1))],
            out_specs=pl.BlockSpec((8, 128), lambda i: (0, 0)),
        )
        jax.jit(fn).lower(jax.ShapeDtypeStruct((8, 128), jnp.float32))
        return True
    except Exception:
        return False


def _choose_tm(M, Kp, Ep, in_bytes, out_bytes, tm_target, tile_budget, weight_bufs):
    """Row tile: as large as the VMEM budget allows, MXU-aligned, and sized so a
    v7x megacore gets >= 2 (preferably an even number of) grid steps."""
    w_bytes = weight_bufs * Kp * Ep * in_bytes + 2 * Ep * 4   # resident V^T + bias

    def tile_bytes(t):
        return (w_bytes
                + 2 * t * Kp * in_bytes     # double-buffered x tile
                + 2 * t * Ep * out_bytes    # double-buffered out tile
                + 2 * t * Ep * 4)           # f32 accumulator / epilogue temporaries

    def snap_down(t):
        if t >= 512:
            return (t // 256) * 256
        if t >= 256:
            return 256
        if t >= 128:
            return 128
        return _round_up(max(t, 8), 8)

    def snap_up(t):
        if t > 256:
            return _round_up(t, 256)
        if t > 128:
            return 256
        return 128

    tm = snap_down(min(tm_target, _round_up(M, 8)))
    while tm > 8 and tile_bytes(tm) > tile_budget:
        tm = snap_down(tm // 2)
    # TODO(synk): if the resident (Kp, Ep) weight alone blows the budget (very
    # large img_dim*embed on v7x's 64 MiB/TC), add an E-axis grid with a
    # two-pass L2 norm instead of shrinking tm into overhead-dominated sizes.

    if M >= 256 and tm >= 128:
        if pl.cdiv(M, tm) == 1:                  # never leave a v7x TC idle
            tm = snap_up(pl.cdiv(M, 2))
        grid = pl.cdiv(M, tm)
        if grid % 2 == 1 and 1 < grid <= 8:      # prefer an even step count
            raw = pl.cdiv(M, grid + 1)
            for cand in (snap_up(raw), snap_down(raw)):
                if 128 <= cand <= tm and pl.cdiv(M, cand) % 2 == 0:
                    tm = cand
                    break
    return max(tm, 8)


# ---------------------------------------------------------------------------
# Jitted forward (pad/cast + pallas_call + slice all fuse inside one jit)
# ---------------------------------------------------------------------------
@functools.partial(
    jax.jit,
    static_argnames=("normalize", "compute_dtype", "out_dtype", "tm",
                     "single_buffer_weights", "vmem_limit", "approx_recip"))
def _forward_jit(images, weight_v, weight_g, bias, *, normalize, compute_dtype,
                 out_dtype, tm, single_buffer_weights, vmem_limit, approx_recip):
    img_dim = images.shape[-1]
    embed = weight_v.shape[0]
    lead = images.shape[:-1]

    x2 = images.reshape(-1, img_dim)
    M = x2.shape[0]

    # Pad the feature dims to lane-dense multiples of 128 only when misaligned
    # (SCAN's 2048/1024 already are). Zero K-padding keeps the contraction
    # exact; zero E-padding columns do not perturb the row L2 norm.
    Kp = _round_up(img_dim, 128) if img_dim % 128 else img_dim
    Ep = _round_up(embed, 128) if embed % 128 else embed

    # weight_norm(dim=None): a single scalar g / ||V||_F; it commutes with the
    # matmul, so only the scalar goes to the kernel (SMEM) and V stays unscaled.
    scale = (jnp.asarray(weight_g, jnp.float32)
             / jnp.sqrt(jnp.sum(weight_v.astype(jnp.float32) ** 2))).reshape(1)

    w = weight_v.astype(compute_dtype)
    if (Ep, Kp) != (embed, img_dim):
        w = jnp.pad(w, ((0, Ep - embed), (0, Kp - img_dim)))
    # Pre-transpose ONCE here (fused in the jit) -> MXU-native (K, E) operand;
    # no per-grid-step XLU transpose of the resident weight inside the kernel.
    w_t = w.T

    b = bias.astype(jnp.float32)
    if Ep != embed:
        b = jnp.pad(b, (0, Ep - embed))
    b_row = b.reshape(1, Ep)

    x_p = x2.astype(compute_dtype)
    if Kp != img_dim:
        x_p = jnp.pad(x_p, ((0, 0), (0, Kp - img_dim)))

    grid = pl.cdiv(M, tm)   # ragged last block handled by Pallas masking
    kernel = functools.partial(_encoder_kernel, normalize=normalize,
                               approx_recip=approx_recip)
    # Weight / bias blocks are grid-invariant -> single-buffer them (if the
    # backend supports pipeline_mode) to free VMEM for a larger row tile.
    const_kwargs = {"pipeline_mode": pl.Buffered(1)} if single_buffer_weights else {}

    out = pl.pallas_call(
        kernel,
        out_shape=jax.ShapeDtypeStruct((M, Ep), out_dtype),
        grid_spec=pltpu.PrefetchScalarGridSpec(
            num_scalar_prefetch=0,
            grid=(grid,),
            in_specs=[
                pl.BlockSpec(memory_space=pltpu.MemorySpace.SMEM),            # scale (1,)
                pl.BlockSpec((tm, Kp), lambda i: (i, 0)),                     # x row tile
                pl.BlockSpec((Kp, Ep), lambda i: (0, 0), **const_kwargs),     # V^T (resident)
                pl.BlockSpec((1, Ep), lambda i: (0, 0), **const_kwargs),      # bias (resident)
            ],
            out_specs=pl.BlockSpec((tm, Ep), lambda i: (i, 0)),
        ),
        compiler_params=pltpu.CompilerParams(
            dimension_semantics=("parallel",),
            vmem_limit_bytes=vmem_limit),
    )(scale, x_p, w_t, b_row)

    if Ep != embed:
        out = out[:, :embed]
    return out.reshape(*lead, embed)


def encoder_image_forward(images, weight_v, weight_g, bias, *,
                          no_imgnorm=False,
                          compute_dtype=jnp.bfloat16,
                          out_dtype=None,
                          tm_target=None,
                          approx_recip=True):
    """images: (..., img_dim); weight_v: (embed, img_dim); weight_g: scalar;
    bias: (embed,).  Returns (..., embed) in `out_dtype` (default: images.dtype).

    Tip: passing out_dtype=jnp.bfloat16 halves the HBM writeback (worthwhile on
    v6e where this op is HBM-bound). For exact parity with the f32 reference,
    use compute_dtype=jnp.float32 and approx_recip=False."""
    img_dim = images.shape[-1]
    embed = weight_v.shape[0]
    if out_dtype is None:
        out_dtype = images.dtype

    M = 1
    for d in images.shape[:-1]:
        M *= int(d)
    Kp = _round_up(img_dim, 128) if img_dim % 128 else img_dim
    Ep = _round_up(embed, 128) if embed % 128 else embed

    tile_budget, vmem_limit, default_tm_target = _vmem_budgets()
    if tm_target is None:
        tm_target = default_tm_target

    single_buffer = _single_buffer_supported()
    weight_bufs = 1 if single_buffer else 2
    in_bytes = jnp.dtype(compute_dtype).itemsize
    out_bytes = jnp.dtype(out_dtype).itemsize
    tm = _choose_tm(M, Kp, Ep, in_bytes, out_bytes, tm_target, tile_budget, weight_bufs)

    return _forward_jit(images, weight_v, weight_g, bias,
                        normalize=not no_imgnorm,
                        compute_dtype=jnp.dtype(compute_dtype),
                        out_dtype=jnp.dtype(out_dtype),
                        tm=tm,
                        single_buffer_weights=single_buffer,
                        vmem_limit=vmem_limit,
                        approx_recip=approx_recip)


# ---------------------------------------------------------------------------
# Reference + test
# ---------------------------------------------------------------------------
def _reference(images, weight_v, weight_g, bias, no_imgnorm=False):
    w = (weight_g / jnp.sqrt(jnp.sum(weight_v ** 2))) * weight_v
    feat = images @ w.T + bias
    if not no_imgnorm:
        norm = jnp.sqrt(jnp.sum(feat ** 2, axis=-1, keepdims=True)) + 1e-8
        feat = feat / norm
    return feat


if __name__ == "__main__":
    key = jax.random.PRNGKey(0)
    batch, n_regions, img_dim, embed_size = 2, 8, 32, 64

    k1, k2, k3 = jax.random.split(key, 3)
    bound = 1.0 / (img_dim ** 0.5)
    images = jax.random.normal(k1, (batch, n_regions, img_dim), jnp.float32)
    weight_v = jax.random.uniform(k2, (embed_size, img_dim), jnp.float32, -bound, bound)
    bias = jax.random.uniform(k3, (embed_size,), jnp.float32, -bound, bound)
    # weight_norm(dim=None) initializes g = ||V||_F; perturb so the scale != 1.
    weight_g = jnp.sqrt(jnp.sum(weight_v ** 2)) * 1.1

    ref = _reference(images, weight_v, weight_g, bias)
    ref_nonorm = _reference(images, weight_v, weight_g, bias, no_imgnorm=True)

    # Default path: bf16 matmul inputs, f32 accumulate, approx reciprocal.
    out = encoder_image_forward(images, weight_v, weight_g, bias)
    out = jax.block_until_ready(out)
    assert out.shape == (batch, n_regions, embed_size)
    err_bf16 = float(jnp.max(jnp.abs(out.astype(jnp.float32) - ref)))
    assert err_bf16 < 3e-2, f"bf16 path max abs err {err_bf16}"

    # Full f32 path with exact reciprocal: tighter check.
    out32 = encoder_image_forward(images, weight_v, weight_g, bias,
                                  compute_dtype=jnp.float32, approx_recip=False)
    out32 = jax.block_until_ready(out32)
    err_f32 = float(jnp.max(jnp.abs(out32 - ref)))
    assert err_f32 < 1e-2, f"f32 path max abs err {err_f32}"

    # no_imgnorm path (skips the L2-norm epilogue).
    out_nn = encoder_image_forward(images, weight_v, weight_g, bias,
                                   no_imgnorm=True, compute_dtype=jnp.float32,
                                   approx_recip=False)
    out_nn = jax.block_until_ready(out_nn)
    err_nn = float(jnp.max(jnp.abs(out_nn - ref_nonorm)))
    assert err_nn < 1e-2, f"no_imgnorm path max abs err {err_nn}"

    print("KERNEL_OK")
</pallas_src>

<mosaic_0001>
module attributes {stable_mosaic.version = 11 : i64} {
  func.func @_encoder_kernel(%arg0: i32, %arg1: memref<1xf32, #tpu.memory_space<smem>>, %arg2: memref<16x128xbf16, #tpu.memory_space<vmem>>, %arg3: memref<128x128xbf16, #tpu.memory_space<vmem>>, %arg4: memref<1x128xf32, #tpu.memory_space<vmem>>, %arg5: memref<16x128xf32, #tpu.memory_space<vmem>>) attributes {dimension_semantics = [#tpu.dimension_semantics<parallel>], iteration_bounds = array<i64: 1>, scalar_prefetch = 0 : i64, scratch_operands = 0 : i64, tpu.core_type = #tpu.core_type<tc>, window_params = [{transform_indices = @transform_0, window_bounds = array<i64: 1>}, {transform_indices = @transform_1, window_bounds = array<i64: 16, 128>}, {pipeline_mode = #tpu.pipeline_mode<synchronous>, transform_indices = @transform_2, window_bounds = array<i64: 128, 128>}, {pipeline_mode = #tpu.pipeline_mode<synchronous>, transform_indices = @transform_3, window_bounds = array<i64: 1, 128>}, {transform_indices = @transform_4, window_bounds = array<i64: 16, 128>}]} {
    %c0 = arith.constant 0 : index
    %0 = memref.load %arg1[%c0] : memref<1xf32, #tpu.memory_space<smem>>
    %c0_0 = arith.constant 0 : index
    %c0_1 = arith.constant 0 : index
    %1 = vector.load %arg2[%c0_0, %c0_1] : memref<16x128xbf16, #tpu.memory_space<vmem>>, vector<16x128xbf16>
    %c0_2 = arith.constant 0 : index
    %c0_3 = arith.constant 0 : index
    %2 = vector.load %arg3[%c0_2, %c0_3] : memref<128x128xbf16, #tpu.memory_space<vmem>>, vector<128x128xbf16>
    %cst = arith.constant dense<0.000000e+00> : vector<16x128xf32>
    %3 = tpu.matmul %1, %2, %cst {dimension_numbers = #tpu.dot_dimension_numbers<[1], [0], [0], [1], [0, 0, 1, 1], [], []>} : vector<16x128xbf16>, vector<128x128xbf16>, vector<16x128xf32> -> vector<16x128xf32>
    %4 = vector.broadcast %0 : f32 to vector<16x128xf32>
    %5 = arith.mulf %3, %4 : vector<16x128xf32>
    %c0_4 = arith.constant 0 : index
    %c0_5 = arith.constant 0 : index
    %6 = vector.load %arg4[%c0_4, %c0_5] : memref<1x128xf32, #tpu.memory_space<vmem>>, vector<1x128xf32>
    %7 = vector.broadcast %6 : vector<1x128xf32> to vector<16x128xf32>
    %8 = arith.addf %5, %7 : vector<16x128xf32>
    %9 = arith.mulf %8, %8 : vector<16x128xf32>
    %cst_6 = arith.constant dense<0.000000e+00> : vector<16xf32>
    %10 = vector.multi_reduction <add>, %9, %cst_6 [1] : vector<16x128xf32> to vector<16xf32>
    %11 = vector.shape_cast %10 : vector<16xf32> to vector<16x1xf32>
    %12 = math.sqrt %11 : vector<16x1xf32>
    %cst_7 = arith.constant 9.99999993E-9 : f32
    %13 = vector.broadcast %cst_7 : f32 to vector<16x1xf32>
    %14 = arith.addf %12, %13 : vector<16x1xf32>
    %15 = tpu.reciprocal %14 {approx = true} : vector<16x1xf32> -> vector<16x1xf32>
    %16 = vector.broadcast %15 : vector<16x1xf32> to vector<16x128xf32>
    %17 = arith.mulf %8, %16 : vector<16x128xf32>
    %c0_8 = arith.constant 0 : index
    %c0_9 = arith.constant 0 : index
    %18 = vector.load %arg5[%c0_8, %c0_9] : memref<16x128xf32, #tpu.memory_space<vmem>>, vector<16x128xf32>
    tpu.vector_store %arg5[%c0_8, %c0_9], %17 {strides = array<i32>} : memref<16x128xf32, #tpu.memory_space<vmem>>, vector<16x128xf32>,
    return
  }
  func.func @transform_0(%arg0: i32) -> i32 {
    %c0_i32 = arith.constant 0 : i32
    %c0_i32_0 = arith.constant 0 : i32
    return %c0_i32 : i32
  }
  func.func @transform_1(%arg0: i32) -> (i32, i32) {
    %c0_i32 = arith.constant 0 : i32
    %c0_i32_0 = arith.constant 0 : i32
    return %arg0, %c0_i32 : i32, i32
  }
  func.func @transform_2(%arg0: i32) -> (i32, i32) {
    %c0_i32 = arith.constant 0 : i32
    %c0_i32_0 = arith.constant 0 : i32
    %c0_i32_1 = arith.constant 0 : i32
    return %c0_i32, %c0_i32_0 : i32, i32
  }
  func.func @transform_3(%arg0: i32) -> (i32, i32) {
    %c0_i32 = arith.constant 0 : i32
    %c0_i32_0 = arith.constant 0 : i32
    %c0_i32_1 = arith.constant 0 : i32
    return %c0_i32, %c0_i32_0 : i32, i32
  }
  func.func @transform_4(%arg0: i32) -> (i32, i32) {
    %c0_i32 = arith.constant 0 : i32
    %c0_i32_0 = arith.constant 0 : i32
    return %arg0, %c0_i32 : i32, i32
  }
}

</mosaic_0001>

<llo_original>
// kernel: _forward_jit.1
$region0: #{_forward_jit.1}
  #allocation0 [shape = 'u32[]', space=smem, size = 0x4, offset = 0x4, fixed_abs, tag = 'smem constant byte address 0x4 - core index']
  #allocation1 [shape = 'u32[144,128]{1,0:T(1,128)}', space=vmem, size = 0x12000, scoped, tag = 'internal scratch']
  #allocation2 [shape = 'f32[1]{0:T(128)S(6)}', space=smem, size = 0x200, scoped, tag = 'scoped memory for _forward_jit.1']
  %s0 = inlined_call_operand.<no memory space> [shape: f32[1], index: 0, kind: input, shape index: {}]
  %s1 = inlined_call_operand.vmem [shape: bf16[16,128], index: 1, kind: input, shape index: {}]
  %s2 = inlined_call_operand.vmem [shape: bf16[128,128], index: 2, kind: input, shape index: {}]
  %s3 = inlined_call_operand.vmem [shape: f32[1,128], index: 3, kind: input, shape index: {}]
  %s4 = inlined_call_operand.vmem [shape: f32[16,128], index: 4, kind: output, shape index: {}]
  %s5 = sld [smem:[#allocation0]]
  $region26: #{_forward_jit.1} parent=0
    _
  %s7 = ssub.s32 1, %s5
  %s8 = scalar_select 0, %s7, %s5
  %9 = sst [smem:[#allocation2]] %s0
  // Predicated region
  $region2: #{_forward_jit.1} parent=0 // pred_check
    _
  $region3: #{_forward_jit.1} parent=0 // pred_check_branch
    %11 = sbr.rel (0) target = $region5
  $region4: #{_forward_jit.1} parent=0 // pred_region
    _
  $region5: #{_forward_jit.1} parent=0 // pred_fallthru
    _
  // Predicated region
  $region6: #{_forward_jit.1} parent=0 // pred_check
    _
  $region7: #{_forward_jit.1} parent=0 // pred_check_branch
    %13 = sbr.rel (0) target = $region9
  $region8: #{_forward_jit.1} parent=0 // pred_region
    _
  $region9: #{_forward_jit.1} parent=0 // pred_fallthru
    _
  // Predicated region
  $region10: #{_forward_jit.1} parent=0 // pred_check
    _
  $region11: #{_forward_jit.1} parent=0 // pred_check_branch
    %15 = sbr.rel (0) target = $region13
  $region12: #{_forward_jit.1} parent=0 // pred_region
    _
  $region13: #{_forward_jit.1} parent=0 // pred_fallthru
    _
  // Predicated region
  $region14: #{_forward_jit.1} parent=0 // pred_check
    _
  $region15: #{_forward_jit.1} parent=0 // pred_check_branch
    %17 = sbr.rel (0) target = $region17
  $region16: #{_forward_jit.1} parent=0 // pred_region
    _
  $region17: #{_forward_jit.1} parent=0 // pred_fallthru
    _
  %s19 = sld [smem:[#allocation2]]
  %v20 = vld [vmem:[%s1] sm:$0xf]
  %v21 = vld [vmem:[%s1 + $0x4] sm:$0xf]
  %v22 = vld [vmem:[%s2] sm:$0xf]
  %v23 = vld [vmem:[%s2 + $0x4] sm:$0xf]
  %v24 = vld [vmem:[%s2 + $0x8] sm:$0xf]
  %v25 = vld [vmem:[%s2 + $0xc] sm:$0xf]
  %v26 = vld [vmem:[%s2 + $0x10] sm:$0xf]
  %v27 = vld [vmem:[%s2 + $0x14] sm:$0xf]
  %v28 = vld [vmem:[%s2 + $0x18] sm:$0xf]
  %v29 = vld [vmem:[%s2 + $0x1c] sm:$0xf]
  %v30 = vld [vmem:[%s2 + $0x20] sm:$0xf]
  %v31 = vld [vmem:[%s2 + $0x24] sm:$0xf]
  %v32 = vld [vmem:[%s2 + $0x28] sm:$0xf]
  %v33 = vld [vmem:[%s2 + $0x2c] sm:$0xf]
  %v34 = vld [vmem:[%s2 + $0x30] sm:$0xf]
  %v35 = vld [vmem:[%s2 + $0x34] sm:$0xf]
  %v36 = vld [vmem:[%s2 + $0x38] sm:$0xf]
  %v37 = vld [vmem:[%s2 + $0x3c] sm:$0xf]
  %v40 = vunpack.c.l.b16 %v20
  %v41 = vunpack.c.l.b16 %v21
  %v42 = vpack.c.b16 %v41, %v40
  %v60 = vunpack.c.l.b16 %v22
  %v61 = vunpack.c.l.b16 %v23
  %v62 = vunpack.c.l.b16 %v24
  %v63 = vunpack.c.l.b16 %v25
  %v64 = vunpack.c.l.b16 %v26
  %v65 = vunpack.c.l.b16 %v27
  %v66 = vunpack.c.l.b16 %v28
  %v67 = vunpack.c.l.b16 %v29
  %v68 = vunpack.c.l.b16 %v30
  %v69 = vunpack.c.l.b16 %v31
  %v70 = vunpack.c.l.b16 %v32
  %v71 = vunpack.c.l.b16 %v33
  %v72 = vunpack.c.l.b16 %v34
  %v73 = vunpack.c.l.b16 %v35
  %v74 = vunpack.c.l.b16 %v36
  %v75 = vunpack.c.l.b16 %v37
  %v76 = vpack.c.b16 %v61, %v60
  %v77 = vpack.c.b16 %v63, %v62
  %v78 = vpack.c.b16 %v65, %v64
  %v79 = vpack.c.b16 %v67, %v66
  %v80 = vpack.c.b16 %v69, %v68
  %v81 = vpack.c.b16 %v71, %v70
  %v82 = vpack.c.b16 %v73, %v72
  %v83 = vpack.c.b16 %v75, %v74
  %92 = vmatprep.subr.bf16.mxu0 0
  %93 = vmatpush1.bf16.msra.mxu0 %v76
  %94 = vmatprep.subr.bf16.mxu0 0
  %95 = vmatpush1.bf16.msra.mxu0 %v77
  %96 = vmatprep.subr.bf16.mxu0 0
  %97 = vmatpush1.bf16.msra.mxu0 %v78
  %98 = vmatprep.subr.bf16.mxu0 0
  %99 = vmatpush1.bf16.msra.mxu0 %v79
  %100 = vmatprep.subr.bf16.mxu0 0
  %101 = vmatpush1.bf16.msra.mxu0 %v80
  %102 = vmatprep.subr.bf16.mxu0 0
  %103 = vmatpush1.bf16.msra.mxu0 %v81
  %104 = vmatprep.subr.bf16.mxu0 0
  %105 = vmatpush1.bf16.msra.mxu0 %v82
  %106 = vmatprep.subr.bf16.mxu0 0
  %107 = vmatpush1.bf16.msra.mxu0 %v83
  %108 = vmatprep.subr.bf16.mxu0 0
  %109 = vmatpush1.bf16.msra.mxu0 0
  %110 = vmatprep.subr.bf16.mxu0 0
  %111 = vmatpush1.bf16.msra.mxu0 0
  %112 = vmatprep.subr.bf16.mxu0 0
  %113 = vmatpush1.bf16.msra.mxu0 0
  %114 = vmatprep.subr.bf16.mxu0 0
  %115 = vmatpush1.bf16.msra.mxu0 0
  %116 = vmatprep.subr.bf16.mxu0 0
  %117 = vmatpush1.bf16.msra.mxu0 0
  %118 = vmatprep.subr.bf16.mxu0 0
  %119 = vmatpush1.bf16.msra.mxu0 0
  %120 = vmatprep.subr.bf16.mxu0 0
  %121 = vmatpush1.bf16.msra.mxu0 0
  %122 = vmatprep.subr.bf16.mxu0 0
  %123 = vmatpush1.bf16.msra.mxu0 0
  %124 = vmatprep.mubr.bf16.mxu0 0
  %125 = vmatmul.mubr.bf16.gmra.mrb[0].mxu0 %v42
  %v126 = vpop.f32.mrb[0].mxu0
  %v127 = vadd.f32 0.0, %v126
  %v128 = vpop.f32.mrb[0].mxu0
  %v129 = vpop.f32.mrb[0].mxu0
  %v130 = vadd.f32 0.0, %v129
  %v131 = vpop.f32.mrb[0].mxu0
  %132 = vdwg.mxu0
  %v133 = vstv %s19
  %v134 = vmul.f32 %v127, %v133
  %v135 = vmul.f32 %v130, %v133
  %v136 = vld [vmem:[%s3] sm:$0x1]
  %v138 = vlaneseq
  %v139 = vshrl.u32 %v138, 7
  %v140 = vsub.s32 0, %v139
  %v141 = vrot.slane %v136, %v140
  %v143 = vadd.f32 %v134, %v141
  %v144 = vadd.f32 %v135, %v141
  %v145 = vmul.f32 %v143, %v143
  %v146 = vmul.f32 %v144, %v144
  %147 = vadd.xlane.f32.xlu0 %v145
  %v148 = vpop.xlane.xlu0 %147
  %149 = vadd.xlane.f32.xlu0 %v146
  %v150 = vpop.xlane.xlu0 %149
  %v151 = vrsqrt.pop %v148
  %v152 = vmul.f32 %v148, %v151
  %vm153 = vcmp.eq.f32.partialorder %v148, inf
  %v154 = vsel %vm153, %v148, %v152
  %vm155 = vcmp.eq.f32.partialorder %v148, 0.0
  %v156 = vand.u32 %v148, 2147483648
  %v157 = vsel %vm155, %v156, %v154
  %v158 = vrsqrt.pop %v150
  %v159 = vmul.f32 %v150, %v158
  %vm160 = vcmp.eq.f32.partialorder %v150, inf
  %v161 = vsel %vm160, %v150, %v159
  %vm162 = vcmp.eq.f32.partialorder %v150, 0.0
  %v163 = vand.u32 %v150, 2147483648
  %v164 = vsel %vm162, %v163, %v161
  %v165 = vadd.f32 %v157, 1e-08
  %v166 = vadd.f32 %v164, 1e-08
  %v167 = vrcp.pop %v165
  %v168 = vrcp.pop %v166
  %v169 = vmul.f32 %v143, %v167
  %v170 = vmul.f32 %v144, %v168
  %171 = vst [vmem:[%s4] sm:$0xff] %v169
  %172 = vst [vmem:[%s4 + $0x8] sm:$0xff] %v170
  // Predicated region
  $region18: #{_forward_jit.1} parent=0 // pred_check
    _
  $region19: #{_forward_jit.1} parent=0 // pred_check_branch
    %174 = sbr.rel (0) target = $region21
  $region20: #{_forward_jit.1} parent=0 // pred_region
    _
  $region21: #{_forward_jit.1} parent=0 // pred_fallthru
    _
  // Predicated region
  $region22: #{_forward_jit.1} parent=0 // pred_check
    _
  $region23: #{_forward_jit.1} parent=0 // pred_check_branch
    %176 = sbr.rel (0) target = $region25
  $region24: #{_forward_jit.1} parent=0 // pred_region
    _
  $region25: #{_forward_jit.1} parent=0 // pred_fallthru
    _

</llo_original>
